<compile_context>
chip_gen: v6e
topology: v6e:2x2x1
jax: 0.10.0
libtpu: 0.0.40
codegen_flags: <defaults>
</compile_context>

<pallas_src>
import jax
import jax.numpy as jnp
from jax.experimental import pallas as pl
from jax.experimental.pallas import tpu as pltpu


def _round_up(x: int, m: int) -> int:
    return (x + m - 1) // m * m


# ---------------------------------------------------------------------------
# Kernel 1: BatchNorm batch statistics.  One pass over the batch tiles
# accumulating sum and sum-of-squares, finalized into fused affine terms:
#   y = x * scale + shift,  scale = gamma / sqrt(var + eps),
#                           shift = beta - mean * scale
# ---------------------------------------------------------------------------
def _make_stats_kernel(tb, n_valid, eps, need_mask):
    def kernel(xc_ref, gamma_ref, beta_ref, scale_ref, shift_ref,
               sum_ref, sq_ref):
        i = pl.program_id(0)

        @pl.when(i == 0)
        def _init():
            sum_ref[...] = jnp.zeros_like(sum_ref)
            sq_ref[...] = jnp.zeros_like(sq_ref)

        xc = xc_ref[...]                                        # (tb, n_cont)
        if need_mask:  # static: only emitted when the batch was padded
            rows = i * tb + jax.lax.broadcasted_iota(jnp.int32, (tb, 1), 0)
            xc = jnp.where(rows < n_valid, xc, 0.0)
        sum_ref[...] += jnp.sum(xc, axis=0, keepdims=True)
        sq_ref[...] += jnp.sum(xc * xc, axis=0, keepdims=True)

        @pl.when(i == pl.num_programs(0) - 1)
        def _finalize():
            inv_n = 1.0 / float(n_valid)
            mean = sum_ref[...] * inv_n
            var = jnp.maximum(sq_ref[...] * inv_n - mean * mean, 0.0)
            inv_std = jax.lax.rsqrt(var + eps)
            scale = gamma_ref[...] * inv_std
            scale_ref[...] = scale
            shift_ref[...] = beta_ref[...] - mean * scale

    return kernel


# ---------------------------------------------------------------------------
# Kernel 2: fused embedding lookup (block-diagonal one-hot matmul) + BatchNorm
# affine, written as ONE lane-dense (padded-to-128) merged output tile.
# ---------------------------------------------------------------------------
def _make_main_kernel(tb, cat_layout, k_pad):
    def kernel(xcat_ref, xcont_ref, w_ref, p_ref, scale_ref, shift_ref,
               out_ref):
        # Fused one-hot for all categorical columns: lanes [k_off, k_off+rows)
        # belong to column j.  Out-of-range ids produce an all-zero row
        # (silent zero embedding; PyTorch nn.Embedding would raise).
        iota = jax.lax.broadcasted_iota(jnp.int32, (tb, k_pad), 1)
        onehot = jnp.zeros((tb, k_pad), jnp.float32)
        for j, (n_rows, k_off) in enumerate(cat_layout):
            idx = xcat_ref[:, j:j + 1]                          # (tb, 1) int32
            hit = (iota == idx + k_off) & (idx >= 0) & (idx < n_rows)
            onehot = onehot + hit.astype(jnp.float32)

        # Single block-diagonal matmul -> (tb, out_pad); embeddings occupy
        # lanes [0, d_total); W is zero-padded to the merged width on host.
        acc = jnp.dot(onehot, w_ref[...], preferred_element_type=jnp.float32)

        # BatchNorm affine on the continuous columns (f32 VPU math), then
        # placed at lanes [d_total, d_total + n_cont) via a constant selector
        # matmul so the single store stays lane-dense (no masked sub-128
        # stores, no unaligned lane concatenation).
        cont = xcont_ref[...] * scale_ref[...] + shift_ref[...]  # (tb, n_cont)
        acc = acc + jnp.dot(cont, p_ref[...],
                            preferred_element_type=jnp.float32)
        out_ref[...] = acc

    return kernel


def cat_embeddings_and_cont(X, tables, gamma, beta, cat_cols_idx,
                            cont_cols_idx, eps=1e-5, tb=256):
    """Pallas forward of CatEmbeddingsAndCont.

    X:             (B, n_columns) float32 tabular input (PyTorch layout).
    tables:        list of embedding tables; table j has shape (vocab_j+1, dim_j).
    gamma, beta:   BatchNorm1d affine parameters, shape (n_cont,) or (1, n_cont).
    cat_cols_idx:  column index in X of each categorical column (table order).
    cont_cols_idx: column indices in X of the continuous columns.
    Returns (x_emb [B, sum(dim_j)], x_cont [B, n_cont]) in float32.
    """
    B = int(X.shape[0])
    n_cat = len(tables)
    n_cont = len(cont_cols_idx)
    rows = [int(t.shape[0]) for t in tables]
    dims = [int(t.shape[1]) for t in tables]
    d_total = int(sum(dims))
    k_total = int(sum(rows))
    k_pad = _round_up(k_total, 8)
    out_pad = _round_up(d_total + n_cont, 128)

    # ---- host-side layout plumbing (no per-element compute) ----------------
    x_cat = X[:, jnp.asarray(cat_cols_idx)].astype(jnp.int32)       # (B, n_cat)
    x_cont = X[:, jnp.asarray(cont_cols_idx)].astype(jnp.float32)   # (B, n_cont)

    tb = min(int(tb), _round_up(B, 8))           # batch tile, multiple of 8
    b_pad = _round_up(B, tb)
    if b_pad != B:
        x_cat = jnp.pad(x_cat, ((0, b_pad - B), (0, 0)))
        x_cont = jnp.pad(x_cont, ((0, b_pad - B), (0, 0)))
    n_tiles = b_pad // tb

    # Stacked block-diagonal embedding weight, zero-padded to the lane-dense
    # merged output width.
    w = jnp.zeros((k_pad, out_pad), jnp.float32)
    cat_layout = []
    k_off = d_off = 0
    for t, r, d in zip(tables, rows, dims):
        w = w.at[k_off:k_off + r, d_off:d_off + d].set(t.astype(jnp.float32))
        cat_layout.append((r, k_off))
        k_off += r
        d_off += d

    # Constant selector placing the n_cont normalized columns at lanes
    # [d_total, d_total + n_cont) of the merged output.
    p = jnp.zeros((n_cont, out_pad), jnp.float32)
    p = p.at[jnp.arange(n_cont), d_total + jnp.arange(n_cont)].set(1.0)

    gamma2 = jnp.reshape(gamma, (1, n_cont)).astype(jnp.float32)
    beta2 = jnp.reshape(beta, (1, n_cont)).astype(jnp.float32)

    # VMEM budget: double-buffered streamed tiles + resident weights, with
    # headroom; capped so it also fits v7x's 64 MiB per-core VMEM.
    per_step = 4 * (tb * n_cat + tb * n_cont + tb * out_pad)
    resident = 4 * (k_pad * out_pad + n_cont * out_pad + 4 * n_cont)
    vmem_limit = int(min(48 * 2 ** 20,
                         max(8 * 2 ** 20, 4 * (2 * per_step + resident))))

    # ---- pass 1: BatchNorm batch statistics (reduction over batch tiles) ---
    stats_kernel = _make_stats_kernel(tb, B, eps, need_mask=(b_pad != B))
    scale, shift = pl.pallas_call(
        stats_kernel,
        out_shape=(jax.ShapeDtypeStruct((1, n_cont), jnp.float32),
                   jax.ShapeDtypeStruct((1, n_cont), jnp.float32)),
        grid_spec=pltpu.PrefetchScalarGridSpec(
            num_scalar_prefetch=0,
            grid=(n_tiles,),
            in_specs=[pl.BlockSpec((tb, n_cont), lambda i: (i, 0)),
                      pl.BlockSpec((1, n_cont), lambda i: (0, 0)),
                      pl.BlockSpec((1, n_cont), lambda i: (0, 0))],
            out_specs=[pl.BlockSpec((1, n_cont), lambda i: (0, 0)),
                       pl.BlockSpec((1, n_cont), lambda i: (0, 0))],
            scratch_shapes=[pltpu.VMEM((1, n_cont), jnp.float32),
                            pltpu.VMEM((1, n_cont), jnp.float32)]),
        compiler_params=pltpu.CompilerParams(
            dimension_semantics=("arbitrary",),
            vmem_limit_bytes=vmem_limit),
    )(x_cont, gamma2, beta2)

    # ---- pass 2: fused embeddings + BatchNorm affine, batch-parallel --------
    main_kernel = _make_main_kernel(tb, tuple(cat_layout), k_pad)
    merged = pl.pallas_call(
        main_kernel,
        out_shape=jax.ShapeDtypeStruct((b_pad, out_pad), jnp.float32),
        grid_spec=pltpu.PrefetchScalarGridSpec(
            num_scalar_prefetch=0,
            grid=(n_tiles,),
            in_specs=[pl.BlockSpec((tb, n_cat), lambda i: (i, 0)),
                      pl.BlockSpec((tb, n_cont), lambda i: (i, 0)),
                      pl.BlockSpec((k_pad, out_pad), lambda i: (0, 0)),
                      pl.BlockSpec((n_cont, out_pad), lambda i: (0, 0)),
                      pl.BlockSpec((1, n_cont), lambda i: (0, 0)),
                      pl.BlockSpec((1, n_cont), lambda i: (0, 0))],
            out_specs=pl.BlockSpec((tb, out_pad), lambda i: (i, 0))),
        compiler_params=pltpu.CompilerParams(
            dimension_semantics=("parallel",),
            vmem_limit_bytes=vmem_limit),
    )(x_cat, x_cont, w, p, scale, shift)

    x_emb = merged[:B, :d_total]
    x_cont_out = merged[:B, d_total:d_total + n_cont]
    return x_emb, x_cont_out


if __name__ == "__main__":
    key = jax.random.PRNGKey(0)

    # Module configuration (mirrors __init__ arguments).
    column_idx = {"c0": 0, "c1": 1, "c2": 2, "n0": 3, "n1": 4, "n2": 5, "n3": 6}
    embed_input = [("c0", 5, 8), ("c1", 7, 16), ("c2", 4, 8)]   # (col, vocab, dim)
    continuous_cols = ["n0", "n1", "n2", "n3"]
    embed_dropout = 0.1   # nn.Dropout: identity at eval time

    cat_cols_idx = [column_idx[c] for c, _, _ in embed_input]
    cont_cols_idx = [column_idx[c] for c in continuous_cols]
    n_cont = len(cont_cols_idx)

    # Deterministic parameters: nn.Embedding ~ N(0,1), padding row 0 zeroed.
    keys = jax.random.split(key, len(embed_input) + 2)
    tables = []
    for k, (_, v, d) in zip(keys[:len(embed_input)], embed_input):
        t = jax.random.normal(k, (v + 1, d), jnp.float32)
        t = t.at[0].set(0.0)          # padding_idx=0
        tables.append(t)
    gamma = jnp.ones((n_cont,), jnp.float32)     # BatchNorm1d default weight
    beta = jnp.zeros((n_cont,), jnp.float32)     # BatchNorm1d default bias

    def make_X(kcat, kcont, batch):
        cat_cols = [
            jax.random.randint(jax.random.fold_in(kcat, j), (batch, 1), 0, v + 1)
            .astype(jnp.float32)
            for j, (_, v, _) in enumerate(embed_input)
        ]
        cont_cols = jax.random.normal(kcont, (batch, n_cont), jnp.float32)
        return jnp.concatenate(cat_cols + [cont_cols], axis=1)   # (batch, 7)

    def reference(X):
        embs = [jnp.take(t, X[:, ci].astype(jnp.int32), axis=0)
                for t, ci in zip(tables, cat_cols_idx)]
        ref_emb = jnp.concatenate(embs, axis=1)
        xc = X[:, jnp.asarray(cont_cols_idx)]
        m = xc.mean(0, keepdims=True)
        v = ((xc - m) ** 2).mean(0, keepdims=True)
        ref_cont = (xc - m) / jnp.sqrt(v + 1e-5) * gamma + beta
        return ref_emb, ref_cont

    kcat, kcont = keys[-2], keys[-1]

    # Case 1: B=8, single batch tile.
    X = make_X(kcat, kcont, 8)
    x_emb, x_cont = cat_embeddings_and_cont(
        X, tables, gamma, beta, cat_cols_idx, cont_cols_idx)
    jax.block_until_ready((x_emb, x_cont))
    ref_emb, ref_cont = reference(X)
    assert x_emb.shape == ref_emb.shape and x_cont.shape == ref_cont.shape
    assert jnp.allclose(x_emb, ref_emb, atol=1e-4), "embedding mismatch (B=8)"
    assert jnp.allclose(x_cont, ref_cont, atol=1e-4), "batchnorm mismatch (B=8)"

    # Case 2: B=20 with tb=8 -> 3 batch tiles plus 4 padded rows, exercising
    # the tiled grid and cross-tile BatchNorm statistics accumulation.
    X2 = make_X(jax.random.fold_in(kcat, 99), jax.random.fold_in(kcont, 99), 20)
    x_emb2, x_cont2 = cat_embeddings_and_cont(
        X2, tables, gamma, beta, cat_cols_idx, cont_cols_idx, tb=8)
    jax.block_until_ready((x_emb2, x_cont2))
    ref_emb2, ref_cont2 = reference(X2)
    assert jnp.allclose(x_emb2, ref_emb2, atol=1e-4), "embedding mismatch (B=20)"
    assert jnp.allclose(x_cont2, ref_cont2, atol=1e-4), "batchnorm mismatch (B=20)"

    print("KERNEL_OK")
</pallas_src>

<mosaic_0001>
module attributes {stable_mosaic.version = 11 : i64} {
  func.func @kernel(%arg0: i32, %arg1: memref<8x4xf32, #tpu.memory_space<vmem>>, %arg2: memref<1x4xf32, #tpu.memory_space<vmem>>, %arg3: memref<1x4xf32, #tpu.memory_space<vmem>>, %arg4: memref<1x4xf32, #tpu.memory_space<vmem>>, %arg5: memref<1x4xf32, #tpu.memory_space<vmem>>, %arg6: memref<1x4xf32, #tpu.memory_space<vmem>>, %arg7: memref<1x4xf32, #tpu.memory_space<vmem>>) attributes {dimension_semantics = [#tpu.dimension_semantics<arbitrary>], iteration_bounds = array<i64: 1>, scalar_prefetch = 0 : i64, scratch_operands = 2 : i64, tpu.core_type = #tpu.core_type<tc>, window_params = [{transform_indices = @transform_0, window_bounds = array<i64: 8, 4>}, {pipeline_mode = #tpu.pipeline_mode<synchronous>, transform_indices = @transform_1, window_bounds = array<i64: 1, 4>}, {pipeline_mode = #tpu.pipeline_mode<synchronous>, transform_indices = @transform_2, window_bounds = array<i64: 1, 4>}, {pipeline_mode = #tpu.pipeline_mode<synchronous>, transform_indices = @transform_3, window_bounds = array<i64: 1, 4>}, {pipeline_mode = #tpu.pipeline_mode<synchronous>, transform_indices = @transform_4, window_bounds = array<i64: 1, 4>}]} {
    %c0_i32 = arith.constant 0 : i32
    %0 = arith.cmpi eq, %arg0, %c0_i32 : i32
    %1 = arith.extui %0 : i1 to i32
    %c0_i32_0 = arith.constant 0 : i32
    %2 = arith.cmpi ne, %1, %c0_i32_0 : i32
    scf.if %2 {
      %cst_13 = arith.constant 0.000000e+00 : f32
      %18 = vector.broadcast %cst_13 : f32 to vector<1x4xf32>
      %c0_14 = arith.constant 0 : index
      %c0_15 = arith.constant 0 : index
      %19 = vector.load %arg6[%c0_14, %c0_15] : memref<1x4xf32, #tpu.memory_space<vmem>>, vector<1x4xf32>
      tpu.vector_store %arg6[%c0_14, %c0_15], %18 {strides = array<i32>} : memref<1x4xf32, #tpu.memory_space<vmem>>, vector<1x4xf32>,
      %cst_16 = arith.constant 0.000000e+00 : f32
      %20 = vector.broadcast %cst_16 : f32 to vector<1x4xf32>
      %c0_17 = arith.constant 0 : index
      %c0_18 = arith.constant 0 : index
      %21 = vector.load %arg7[%c0_17, %c0_18] : memref<1x4xf32, #tpu.memory_space<vmem>>, vector<1x4xf32>
      tpu.vector_store %arg7[%c0_17, %c0_18], %20 {strides = array<i32>} : memref<1x4xf32, #tpu.memory_space<vmem>>, vector<1x4xf32>,
    } else {
    }
    %c0 = arith.constant 0 : index
    %c0_1 = arith.constant 0 : index
    %3 = vector.load %arg1[%c0, %c0_1] : memref<8x4xf32, #tpu.memory_space<vmem>>, vector<8x4xf32>
    %c0_2 = arith.constant 0 : index
    %c0_3 = arith.constant 0 : index
    %4 = vector.load %arg6[%c0_2, %c0_3] : memref<1x4xf32, #tpu.memory_space<vmem>>, vector<1x4xf32>
    %cst = arith.constant dense<0.000000e+00> : vector<4xf32>
    %5 = vector.multi_reduction <add>, %3, %cst [0] : vector<8x4xf32> to vector<4xf32>
    %6 = vector.shape_cast %5 : vector<4xf32> to vector<1x4xf32>
    %7 = arith.addf %4, %6 : vector<1x4xf32>
    %c0_4 = arith.constant 0 : index
    %c0_5 = arith.constant 0 : index
    %8 = vector.load %arg6[%c0_4, %c0_5] : memref<1x4xf32, #tpu.memory_space<vmem>>, vector<1x4xf32>
    tpu.vector_store %arg6[%c0_4, %c0_5], %7 {strides = array<i32>} : memref<1x4xf32, #tpu.memory_space<vmem>>, vector<1x4xf32>,
    %c0_6 = arith.constant 0 : index
    %c0_7 = arith.constant 0 : index
    %9 = vector.load %arg7[%c0_6, %c0_7] : memref<1x4xf32, #tpu.memory_space<vmem>>, vector<1x4xf32>
    %10 = arith.mulf %3, %3 : vector<8x4xf32>
    %cst_8 = arith.constant dense<0.000000e+00> : vector<4xf32>
    %11 = vector.multi_reduction <add>, %10, %cst_8 [0] : vector<8x4xf32> to vector<4xf32>
    %12 = vector.shape_cast %11 : vector<4xf32> to vector<1x4xf32>
    %13 = arith.addf %9, %12 : vector<1x4xf32>
    %c0_9 = arith.constant 0 : index
    %c0_10 = arith.constant 0 : index
    %14 = vector.load %arg7[%c0_9, %c0_10] : memref<1x4xf32, #tpu.memory_space<vmem>>, vector<1x4xf32>
    tpu.vector_store %arg7[%c0_9, %c0_10], %13 {strides = array<i32>} : memref<1x4xf32, #tpu.memory_space<vmem>>, vector<1x4xf32>,
    %c0_i32_11 = arith.constant 0 : i32
    %15 = arith.cmpi eq, %arg0, %c0_i32_11 : i32
    %16 = arith.extui %15 : i1 to i32
    %c0_i32_12 = arith.constant 0 : i32
    %17 = arith.cmpi ne, %16, %c0_i32_12 : i32
    scf.if %17 {
      %c0_13 = arith.constant 0 : index
      %c0_14 = arith.constant 0 : index
      %18 = vector.load %arg6[%c0_13, %c0_14] : memref<1x4xf32, #tpu.memory_space<vmem>>, vector<1x4xf32>
      %cst_15 = arith.constant 1.250000e-01 : f32
      %19 = vector.broadcast %cst_15 : f32 to vector<1x4xf32>
      %20 = arith.mulf %18, %19 : vector<1x4xf32>
      %c0_16 = arith.constant 0 : index
      %c0_17 = arith.constant 0 : index
      %21 = vector.load %arg7[%c0_16, %c0_17] : memref<1x4xf32, #tpu.memory_space<vmem>>, vector<1x4xf32>
      %cst_18 = arith.constant 1.250000e-01 : f32
      %22 = vector.broadcast %cst_18 : f32 to vector<1x4xf32>
      %23 = arith.mulf %21, %22 : vector<1x4xf32>
      %24 = arith.mulf %20, %20 : vector<1x4xf32>
      %25 = arith.subf %23, %24 : vector<1x4xf32>
      %cst_19 = arith.constant 0.000000e+00 : f32
      %26 = vector.broadcast %cst_19 : f32 to vector<1x4xf32>
      %27 = arith.maximumf %25, %26 : vector<1x4xf32>
      %cst_20 = arith.constant 9.99999974E-6 : f32
      %28 = vector.broadcast %cst_20 : f32 to vector<1x4xf32>
      %29 = arith.addf %27, %28 : vector<1x4xf32>
      %30 = math.rsqrt %29 : vector<1x4xf32>
      %c0_21 = arith.constant 0 : index
      %c0_22 = arith.constant 0 : index
      %31 = vector.load %arg2[%c0_21, %c0_22] : memref<1x4xf32, #tpu.memory_space<vmem>>, vector<1x4xf32>
      %32 = arith.mulf %31, %30 : vector<1x4xf32>
      %c0_23 = arith.constant 0 : index
      %c0_24 = arith.constant 0 : index
      %33 = vector.load %arg4[%c0_23, %c0_24] : memref<1x4xf32, #tpu.memory_space<vmem>>, vector<1x4xf32>
      tpu.vector_store %arg4[%c0_23, %c0_24], %32 {strides = array<i32>} : memref<1x4xf32, #tpu.memory_space<vmem>>, vector<1x4xf32>,
      %c0_25 = arith.constant 0 : index
      %c0_26 = arith.constant 0 : index
      %34 = vector.load %arg3[%c0_25, %c0_26] : memref<1x4xf32, #tpu.memory_space<vmem>>, vector<1x4xf32>
      %35 = arith.mulf %20, %32 : vector<1x4xf32>
      %36 = arith.subf %34, %35 : vector<1x4xf32>
      %c0_27 = arith.constant 0 : index
      %c0_28 = arith.constant 0 : index
      %37 = vector.load %arg5[%c0_27, %c0_28] : memref<1x4xf32, #tpu.memory_space<vmem>>, vector<1x4xf32>
      tpu.vector_store %arg5[%c0_27, %c0_28], %36 {strides = array<i32>} : memref<1x4xf32, #tpu.memory_space<vmem>>, vector<1x4xf32>,
    } else {
    }
    return
  }
  func.func @transform_0(%arg0: i32) -> (i32, i32) {
    %c0_i32 = arith.constant 0 : i32
    %c0_i32_0 = arith.constant 0 : i32
    return %arg0, %c0_i32 : i32, i32
  }
  func.func @transform_1(%arg0: i32) -> (i32, i32) {
    %c0_i32 = arith.constant 0 : i32
    %c0_i32_0 = arith.constant 0 : i32
    %c0_i32_1 = arith.constant 0 : i32
    return %c0_i32, %c0_i32_0 : i32, i32
  }
  func.func @transform_2(%arg0: i32) -> (i32, i32) {
    %c0_i32 = arith.constant 0 : i32
    %c0_i32_0 = arith.constant 0 : i32
    %c0_i32_1 = arith.constant 0 : i32
    return %c0_i32, %c0_i32_0 : i32, i32
  }
  func.func @transform_3(%arg0: i32) -> (i32, i32) {
    %c0_i32 = arith.constant 0 : i32
    %c0_i32_0 = arith.constant 0 : i32
    %c0_i32_1 = arith.constant 0 : i32
    return %c0_i32, %c0_i32_0 : i32, i32
  }
  func.func @transform_4(%arg0: i32) -> (i32, i32) {
    %c0_i32 = arith.constant 0 : i32
    %c0_i32_0 = arith.constant 0 : i32
    %c0_i32_1 = arith.constant 0 : i32
    return %c0_i32, %c0_i32_0 : i32, i32
  }
}

</mosaic_0001>

<llo_original>
// kernel: tpu_custom_call.1
$region0: #{tpu_custom_call.1}
  #allocation0 [shape = 'u32[]', space=smem, size = 0x4, offset = 0x4, fixed_abs, tag = 'smem constant byte address 0x4 - core index']
  #allocation1 [shape = 'u32[144,128]{1,0:T(1,128)}', space=vmem, size = 0x12000, scoped, tag = 'internal scratch']
  #allocation2 [shape = 'f32[1,4]{1,0:T(1,128)}', space=vmem, size = 0x200, scoped, tag = 'scratch operand']
  #allocation3 [shape = 'f32[1,4]{1,0:T(1,128)}', space=vmem, size = 0x200, scoped, tag = 'scratch operand']
  %s0 = inlined_call_operand.vmem [shape: f32[8,4], index: 0, kind: input, shape index: {}]
  %s1 = inlined_call_operand.vmem [shape: f32[1,4], index: 1, kind: input, shape index: {}]
  %s2 = inlined_call_operand.vmem [shape: f32[1,4], index: 2, kind: input, shape index: {}]
  %s3 = inlined_call_operand.hbm [shape: f32[1,4], index: 3, kind: output, shape index: {0}]
  %s4 = inlined_call_operand.hbm [shape: f32[1,4], index: 4, kind: output, shape index: {1}]
  %5 = xla_tuple %s3, %s4
  %s6 = sld [smem:[#allocation0]]
  $region38: #{tpu_custom_call.1} parent=0
    _
  %s8 = ssub.s32 1, %s6
  %s9 = scalar_select 0, %s8, %s6
  $region1: #{tpu_custom_call.1} parent=0
    #allocation4 [shape = 'u8[512]{0}', space=vmem, size = 0x400, scoped, tag = 'output window, operand 0, single buffered']
    #allocation5 [shape = 's32[1]{0}', space=sflag, size = 0x4, scoped, tag = 'scoped memory for tpu_custom_call.1']
    #allocation6 [shape = 'u8[512]{0}', space=vmem, size = 0x400, scoped, tag = 'output window, operand 1, single buffered']
    #allocation7 [shape = 's32[1]{0}', space=sflag, size = 0x4, scoped, tag = 'scoped memory for tpu_custom_call.1']
    %10 = vsyncpa [#allocation5], 0
    %11 = vsyncpa [#allocation7], 0
    // Predicated region
    $region2: #{tpu_custom_call.1} parent=1 // pred_check
      _
    $region3: #{tpu_custom_call.1} parent=1 // pred_check_branch
      %13 = sbr.rel (0) target = $region5
    $region4: #{tpu_custom_call.1} parent=1 // pred_region
      _
    $region5: #{tpu_custom_call.1} parent=1 // pred_fallthru
      _
    // Predicated region
    $region6: #{tpu_custom_call.1} parent=1 // pred_check
      _
    $region7: #{tpu_custom_call.1} parent=1 // pred_check_branch
      %15 = sbr.rel (0) target = $region9
    $region8: #{tpu_custom_call.1} parent=1 // pred_region
      _
    $region9: #{tpu_custom_call.1} parent=1 // pred_fallthru
      _
    // Predicated region
    $region10: #{tpu_custom_call.1} parent=1 // pred_check
      _
    $region11: #{tpu_custom_call.1} parent=1 // pred_check_branch
      %17 = sbr.rel (0) target = $region13
    $region12: #{tpu_custom_call.1} parent=1 // pred_region
      _
    $region13: #{tpu_custom_call.1} parent=1 // pred_fallthru
      _
    %p18 = scmp.eq.s32.totalorder 0, 0
    // Predicated region
    $region14: #{tpu_custom_call.1} parent=1 // pred_check
      %p19 = pneg %p18
    $region15: #{tpu_custom_call.1} parent=1 // pred_check_branch
      %21 = sbr.rel (%p19) target = $region17
    $region16: #{tpu_custom_call.1} parent=1 // pred_region
      %vm22 = vcmask 24576
      %23 = vst.msk [vmem:[#allocation2] sm:$0x1] %vm22, 0.0
      %24 = vst.msk [vmem:[#allocation3] sm:$0x1] %vm22, 0.0
    $region17: #{tpu_custom_call.1} parent=1 // pred_fallthru
      _
    %v25 = vld [vmem:[%s0] sm:$0xff]
    %v26 = vld [vmem:[#allocation2] sm:$0x1]
    %vm27 = vcmask 31744
    %v28 = vsel %vm27, %v25, 0.0
    %v29 = vrot.slane %v28, 4
    %v30 = vadd.f32 %v28, %v29
    %v31 = vrot.slane %v30, 2
    %v32 = vadd.f32 %v30, %v31
    %v33 = vrot.slane %v32, 1
    %v34 = vadd.f32 %v32, %v33
    %v35 = vadd.f32 %v26, %v34
    %vm36 = vcmask 24576
    %37 = vst.msk [vmem:[#allocation2] sm:$0x1] %vm36, %v35
    %v38 = vld [vmem:[#allocation3] sm:$0x1]
    %v39 = vmul.f32 %v25, %v25
    %v40 = vsel %vm27, %v39, 0.0
    %v41 = vrot.slane %v40, 4
    %v42 = vadd.f32 %v40, %v41
    %v43 = vrot.slane %v42, 2
    %v44 = vadd.f32 %v42, %v43
    %v45 = vrot.slane %v44, 1
    %v46 = vadd.f32 %v44, %v45
    %v47 = vadd.f32 %v38, %v46
    %48 = vst.msk [vmem:[#allocation3] sm:$0x1] %vm36, %v47
    // Predicated region
    $region18: #{tpu_custom_call.1} parent=1 // pred_check
      %p49 = pneg %p18
    $region19: #{tpu_custom_call.1} parent=1 // pred_check_branch
      %51 = sbr.rel (%p49) target = $region21
    $region20: #{tpu_custom_call.1} parent=1 // pred_region
      %v52 = vld [vmem:[#allocation2] sm:$0x1]
      %v53 = vmul.f32 %v52, 0.125
      %v54 = vld [vmem:[#allocation3] sm:$0x1]
      %v55 = vmul.f32 %v54, 0.125
      %v56 = vmul.f32 %v53, %v53
      %v57 = vsub.f32 %v55, %v56
      %v58 = vmax.f32 %v57, 0.0
      %v59 = vadd.f32 %v58, 1e-05
      %v60 = vrsqrt.pop %v59
      %v61 = vld [vmem:[%s1] sm:$0x1]
      %v62 = vmul.f32 %v61, %v60
      %63 = vst.msk [vmem:[#allocation4] sm:$0x1] %vm36, %v62
      %v64 = vld [vmem:[%s2] sm:$0x1]
      %v65 = vmul.f32 %v53, %v62
      %v66 = vsub.f32 %v64, %v65
      %67 = vst.msk [vmem:[#allocation6] sm:$0x1] %vm36, %v66
    $region21: #{tpu_custom_call.1} parent=1 // pred_fallthru
      _
    // Predicated region
    $region22: #{tpu_custom_call.1} parent=1 // pred_check
      _
    $region23: #{tpu_custom_call.1} parent=1 // pred_check_branch
      %69 = sbr.rel (0) target = $region25
    $region24: #{tpu_custom_call.1} parent=1 // pred_region
      %s71 = ssub.s32 16, 16
      %72 = vsyncadd [#allocation5], %s71
      %s74 = sshll.u32 [#allocation4], 4
      %s75 = int_to_ptr.vmem [resolvable:$true] %s74
      %77 = dma.vmem_to_hbm [thread:$0]  %s75, 16, %s3, [#allocation5]
    $region25: #{tpu_custom_call.1} parent=1 // pred_fallthru
      _
    // Predicated region
    $region26: #{tpu_custom_call.1} parent=1 // pred_check
      _
    $region27: #{tpu_custom_call.1} parent=1 // pred_check_branch
      %79 = sbr.rel (0) target = $region29
    $region28: #{tpu_custom_call.1} parent=1 // pred_region
      %s81 = ssub.s32 16, 16
      %82 = vsyncadd [#allocation7], %s81
      %s84 = sshll.u32 [#allocation6], 4
      %s85 = int_to_ptr.vmem [resolvable:$true] %s84
      %87 = dma.vmem_to_hbm [thread:$0]  %s85, 16, %s4, [#allocation7]
    $region29: #{tpu_custom_call.1} parent=1 // pred_fallthru
      _
    // Predicated region
    $region30: #{tpu_custom_call.1} parent=1 // pred_check
      _
    $region31: #{tpu_custom_call.1} parent=1 // pred_check_branch
      %89 = sbr.rel (0) target = $region33
    $region32: #{tpu_custom_call.1} parent=1 // pred_region
      %90 = dma.done [#allocation5], 16
    $region33: #{tpu_custom_call.1} parent=1 // pred_fallthru
      _
    // Predicated region
    $region34: #{tpu_custom_call.1} parent=1 // pred_check
      _
    $region35: #{tpu_custom_call.1} parent=1 // pred_check_branch
      %92 = sbr.rel (0) target = $region37
    $region36: #{tpu_custom_call.1} parent=1 // pred_region
      %93 = dma.done [#allocation7], 16
    $region37: #{tpu_custom_call.1} parent=1 // pred_fallthru
      _
    %94 = vsyncpa [#allocation5], 1
    %95 = vsyncpa [#allocation7], 1

</llo_original>
